<compile_context>
chip_gen: v7x
topology: tpu7x:2x2x1
jax: 0.10.0
libtpu: 0.0.40
codegen_flags: <defaults>
</compile_context>

<pallas_src>
import functools

import jax
import jax.numpy as jnp
import numpy as np
from jax.experimental import pallas as pl
from jax.experimental.pallas import tpu as pltpu


def _round_up(n, m):
    return ((n + m - 1) // m) * m


def hubert_cls_kernel(x_ref, wf_ref, w1_ref, b1_ref, w2_ref, b2_ref,
                      hidden_ref, logits_ref, pooled_ref, *, inv_t):
    t = pl.program_id(0)

    @pl.when(t == 0)
    def _init():
        # Only the pooled-sum accumulator needs init; logits is fully written
        # on the final step (same output block across the whole grid axis).
        pooled_ref[...] = jnp.zeros_like(pooled_ref)

    B, TT, Fp = x_ref.shape
    Hp = wf_ref.shape[1]

    # (B, TT, Fp) -> (B*TT, Fp): merges leading dims only (TT % 8 == 0,
    # Fp % 128 == 0), so the (8,128) tile structure is preserved -> no
    # relayout copy.
    x2 = x_ref[...].reshape(B * TT, Fp)                               # bf16
    hid = jnp.dot(x2, wf_ref[...],
                  preferred_element_type=jnp.float32)                 # (B*TT, Hp) f32
    hid3 = hid.reshape(B, TT, Hp)

    # last_hidden_state tile: lane-dense (Hp multiple of 128) store.
    hidden_ref[...] = hid3.astype(hidden_ref.dtype)

    # attention_mask is None -> mean over time; accumulate the sum on the fly.
    # Padded time rows are all-zero frames and the projection has no bias, so
    # they contribute 0 to the sum; divide by the true T at the end.  The
    # cross-sublane reduce rides the XLU slot and is hidden under the MXU /
    # DMA work of the same tile.
    pooled_ref[...] += jnp.sum(hid3, axis=1)                          # (B, Hp) f32

    @pl.when(t == pl.num_programs(0) - 1)
    def _final():
        pooled = pooled_ref[...] * inv_t                              # (B, Hp) f32
        # classifier = Linear(H, Chid) -> Tanh -> Linear(Chid, num_labels),
        # kept in f32 (tiny matrices; tanh goes to the EUP).
        h1 = jnp.tanh(jnp.dot(pooled, w1_ref[...],
                              preferred_element_type=jnp.float32) + b1_ref[...])
        logits_ref[...] = (jnp.dot(h1, w2_ref[...],
                                   preferred_element_type=jnp.float32) + b2_ref[...])


def hubert_for_ecg_classification(x_raw, params, *, num_frames,
                                  time_tile=None, hidden_dtype=jnp.float32):
    """x_raw: (B, L) raw ECG signal.  Returns (logits, last_hidden_state)."""
    B, L = x_raw.shape
    T = num_frames
    F = L // T

    wf, w1, b1, w2, b2 = (params["wf"], params["w1"], params["b1"],
                          params["w2"], params["b2"])
    H = wf.shape[1]
    C = w1.shape[1]
    NL = w2.shape[1]

    # Lane / contraction padding (multiples of 128).
    Fp = _round_up(F, 128)
    Hp = _round_up(H, 128)
    Cp = _round_up(C, 128)
    NLp = _round_up(NL, 128)

    hbytes = jnp.dtype(hidden_dtype).itemsize

    # Time tile: as big as a modest per-buffer VMEM budget allows (x-tile and
    # hidden-tile are each double-buffered), capped so T is never padded
    # excessively.  Larger tiles amortize the ~0.35 us per-grid-step overhead.
    if time_tile is None:
        bytes_per_row = B * (Fp * 2 + Hp * hbytes)            # bf16 x + hidden
        tt = (4 * 1024 * 1024) // max(1, bytes_per_row)
        tt = max(8, min(512, (tt // 8) * 8))
        tt = min(tt, _round_up(T, 8))
    else:
        tt = _round_up(time_tile, 8)
    Tp = _round_up(T, tt)

    # Framing + padding glue (plain JAX); bf16 matmul operands for the big
    # projection, f32 for the tiny classifier.
    x = x_raw.reshape(B, T, F)
    x = jnp.pad(x, ((0, 0), (0, Tp - T), (0, Fp - F))).astype(jnp.bfloat16)
    wf_p = jnp.pad(wf, ((0, Fp - F), (0, Hp - H))).astype(jnp.bfloat16)
    w1_p = jnp.pad(w1, ((0, Hp - H), (0, Cp - C))).astype(jnp.float32)
    b1_p = jnp.pad(b1.reshape(1, -1), ((0, 0), (0, Cp - C))).astype(jnp.float32)
    w2_p = jnp.pad(w2, ((0, Cp - C), (0, NLp - NL))).astype(jnp.float32)
    b2_p = jnp.pad(b2.reshape(1, -1), ((0, 0), (0, NLp - NL))).astype(jnp.float32)

    grid = (Tp // tt,)

    kernel = functools.partial(hubert_cls_kernel, inv_t=1.0 / T)

    flops = 2 * B * Tp * Fp * Hp + 2 * B * Hp * Cp + 2 * B * Cp * NLp
    bytes_accessed = (B * Tp * Fp * 2 + Fp * Hp * 2
                      + (Hp * Cp + Cp + Cp * NLp + NLp) * 4
                      + B * Tp * Hp * hbytes + B * NLp * 4)
    cost = pl.CostEstimate(flops=flops, transcendentals=B * Cp,
                           bytes_accessed=bytes_accessed)

    # Conservative VMEM budget: double-buffered x + hidden tiles, resident
    # weights, pooled scratch, plus slack.  Stays well under the 64 MiB
    # physical VMEM of v7x.
    vmem_need = (2 * tt * B * Fp * 2 + 2 * tt * B * Hp * hbytes
                 + Fp * Hp * 2 + (Hp * Cp + Cp + Cp * NLp + NLp) * 4
                 + B * Hp * 4 + B * NLp * 4)
    vmem_limit = min(48 * 1024 * 1024,
                     max(16 * 1024 * 1024, _round_up(2 * vmem_need, 1 << 20)))

    hidden_p, logits_p = pl.pallas_call(
        kernel,
        grid=grid,
        in_specs=[
            pl.BlockSpec((B, tt, Fp), lambda t: (0, t, 0)),   # streamed x frames
            pl.BlockSpec((Fp, Hp), lambda t: (0, 0)),         # resident projection
            pl.BlockSpec((Hp, Cp), lambda t: (0, 0)),         # classifier L1 weight
            pl.BlockSpec((1, Cp), lambda t: (0, 0)),          # classifier L1 bias
            pl.BlockSpec((Cp, NLp), lambda t: (0, 0)),        # classifier L2 weight
            pl.BlockSpec((1, NLp), lambda t: (0, 0)),         # classifier L2 bias
        ],
        out_specs=(
            pl.BlockSpec((B, tt, Hp), lambda t: (0, t, 0)),   # last_hidden_state tile
            pl.BlockSpec((B, NLp), lambda t: (0, 0)),         # logits (resident)
        ),
        out_shape=(
            jax.ShapeDtypeStruct((B, Tp, Hp), hidden_dtype),
            jax.ShapeDtypeStruct((B, NLp), jnp.float32),
        ),
        scratch_shapes=[pltpu.VMEM((B, Hp), jnp.float32)],    # pooled-sum accumulator
        compiler_params=pltpu.CompilerParams(
            # Time axis carries the pooled-sum reduction -> "arbitrary".
            dimension_semantics=("arbitrary",),
            vmem_limit_bytes=vmem_limit),
        cost_estimate=cost,
    )(x, wf_p, w1_p, b1_p, w2_p, b2_p)

    hidden = hidden_p[:, :T, :H]
    logits = logits_p[:, :NL]
    return logits, hidden


def init_params(key, frame_size, hidden_size, classifier_hidden_size, num_labels):
    """Deterministic synthetic parameter init (no checkpoint loading)."""
    k0, k1, k2, k3, k4 = jax.random.split(key, 5)
    return {
        "wf": jax.random.normal(k0, (frame_size, hidden_size), jnp.float32) * 0.05,
        "w1": jax.random.normal(k1, (hidden_size, classifier_hidden_size), jnp.float32) * 0.05,
        "b1": jax.random.normal(k2, (1, classifier_hidden_size), jnp.float32) * 0.01,
        "w2": jax.random.normal(k3, (classifier_hidden_size, num_labels), jnp.float32) * 0.05,
        "b2": jax.random.normal(k4, (1, num_labels), jnp.float32) * 0.01,
    }


def _reference(x_raw, params, num_frames):
    B, L = x_raw.shape
    T = num_frames
    F = L // T
    x = x_raw.reshape(B, T, F)
    hid = jnp.einsum("btf,fh->bth", x, params["wf"])
    pooled = hid.mean(axis=1)
    h1 = jnp.tanh(pooled @ params["w1"] + params["b1"])
    logits = h1 @ params["w2"] + params["b2"]
    return logits, hid


if __name__ == "__main__":
    # Small shapes consistent with the module's forward:
    #   batch B=2, raw signal L=128 framed into T=8 frames of F=16,
    #   hidden_size H=32, classifier_hidden_size=32, num_labels=5.
    B, T, F = 2, 8, 16
    H, CHID, NUM_LABELS = 32, 32, 5

    key = jax.random.PRNGKey(0)
    kx, kp = jax.random.split(key)
    x_raw = jax.random.normal(kx, (B, T * F), jnp.float32)
    params = init_params(kp, F, H, CHID, NUM_LABELS)

    logits, hidden = hubert_for_ecg_classification(x_raw, params, num_frames=T)
    jax.block_until_ready((logits, hidden))

    assert logits.shape == (B, NUM_LABELS)
    assert hidden.shape == (B, T, H)

    # Loose check vs pure-JAX reference (kernel matmuls use bf16 operands).
    ref_logits, ref_hidden = _reference(x_raw, params, T)
    np.testing.assert_allclose(np.asarray(hidden), np.asarray(ref_hidden),
                               atol=1e-1, rtol=1e-1)
    np.testing.assert_allclose(np.asarray(logits), np.asarray(ref_logits),
                               atol=1e-1, rtol=1e-1)
    print("KERNEL_OK")
</pallas_src>

<mosaic_0001>
module attributes {stable_mosaic.version = 11 : i64} {
  func.func @hubert_cls_kernel(%arg0: i32, %arg1: memref<2x8x128xbf16, #tpu.memory_space<vmem>>, %arg2: memref<128x128xbf16, #tpu.memory_space<vmem>>, %arg3: memref<128x128xf32, #tpu.memory_space<vmem>>, %arg4: memref<1x128xf32, #tpu.memory_space<vmem>>, %arg5: memref<128x128xf32, #tpu.memory_space<vmem>>, %arg6: memref<1x128xf32, #tpu.memory_space<vmem>>, %arg7: memref<2x8x128xf32, #tpu.memory_space<vmem>>, %arg8: memref<2x128xf32, #tpu.memory_space<vmem>>, %arg9: memref<2x128xf32, #tpu.memory_space<vmem>>) attributes {dimension_semantics = [#tpu.dimension_semantics<arbitrary>], iteration_bounds = array<i64: 1>, scalar_prefetch = 0 : i64, scratch_operands = 1 : i64, tpu.core_type = #tpu.core_type<tc>, window_params = [{transform_indices = @transform_0, window_bounds = array<i64: 2, 8, 128>}, {pipeline_mode = #tpu.pipeline_mode<synchronous>, transform_indices = @transform_1, window_bounds = array<i64: 128, 128>}, {pipeline_mode = #tpu.pipeline_mode<synchronous>, transform_indices = @transform_2, window_bounds = array<i64: 128, 128>}, {pipeline_mode = #tpu.pipeline_mode<synchronous>, transform_indices = @transform_3, window_bounds = array<i64: 1, 128>}, {pipeline_mode = #tpu.pipeline_mode<synchronous>, transform_indices = @transform_4, window_bounds = array<i64: 128, 128>}, {pipeline_mode = #tpu.pipeline_mode<synchronous>, transform_indices = @transform_5, window_bounds = array<i64: 1, 128>}, {transform_indices = @transform_6, window_bounds = array<i64: 2, 8, 128>}, {pipeline_mode = #tpu.pipeline_mode<synchronous>, transform_indices = @transform_7, window_bounds = array<i64: 2, 128>}]} {
    %c0_i32 = arith.constant 0 : i32
    %0 = arith.cmpi eq, %arg0, %c0_i32 : i32
    %1 = arith.extui %0 : i1 to i32
    %c0_i32_0 = arith.constant 0 : i32
    %2 = arith.cmpi ne, %1, %c0_i32_0 : i32
    scf.if %2 {
      %cst_15 = arith.constant 0.000000e+00 : f32
      %16 = vector.broadcast %cst_15 : f32 to vector<2x128xf32>
      %c0_16 = arith.constant 0 : index
      %c0_17 = arith.constant 0 : index
      %17 = vector.load %arg9[%c0_16, %c0_17] : memref<2x128xf32, #tpu.memory_space<vmem>>, vector<2x128xf32>
      tpu.vector_store %arg9[%c0_16, %c0_17], %16 {strides = array<i32>} : memref<2x128xf32, #tpu.memory_space<vmem>>, vector<2x128xf32>,
    } else {
    }
    %c0 = arith.constant 0 : index
    %c0_1 = arith.constant 0 : index
    %c0_2 = arith.constant 0 : index
    %3 = vector.load %arg1[%c0, %c0_1, %c0_2] : memref<2x8x128xbf16, #tpu.memory_space<vmem>>, vector<2x8x128xbf16>
    %4 = vector.shape_cast %3 : vector<2x8x128xbf16> to vector<16x128xbf16>
    %c0_3 = arith.constant 0 : index
    %c0_4 = arith.constant 0 : index
    %5 = vector.load %arg2[%c0_3, %c0_4] : memref<128x128xbf16, #tpu.memory_space<vmem>>, vector<128x128xbf16>
    %cst = arith.constant dense<0.000000e+00> : vector<16x128xf32>
    %6 = tpu.matmul %4, %5, %cst {dimension_numbers = #tpu.dot_dimension_numbers<[1], [0], [0], [1], [0, 0, 1, 1], [], []>} : vector<16x128xbf16>, vector<128x128xbf16>, vector<16x128xf32> -> vector<16x128xf32>
    %7 = vector.shape_cast %6 : vector<16x128xf32> to vector<2x8x128xf32>
    %c0_5 = arith.constant 0 : index
    %c0_6 = arith.constant 0 : index
    %c0_7 = arith.constant 0 : index
    %8 = vector.load %arg7[%c0_5, %c0_6, %c0_7] : memref<2x8x128xf32, #tpu.memory_space<vmem>>, vector<2x8x128xf32>
    tpu.vector_store %arg7[%c0_5, %c0_6, %c0_7], %7 {strides = array<i32>} : memref<2x8x128xf32, #tpu.memory_space<vmem>>, vector<2x8x128xf32>,
    %c0_8 = arith.constant 0 : index
    %c0_9 = arith.constant 0 : index
    %9 = vector.load %arg9[%c0_8, %c0_9] : memref<2x128xf32, #tpu.memory_space<vmem>>, vector<2x128xf32>
    %cst_10 = arith.constant dense<0.000000e+00> : vector<2x128xf32>
    %10 = vector.multi_reduction <add>, %7, %cst_10 [1] : vector<2x8x128xf32> to vector<2x128xf32>
    %11 = arith.addf %9, %10 : vector<2x128xf32>
    %c0_11 = arith.constant 0 : index
    %c0_12 = arith.constant 0 : index
    %12 = vector.load %arg9[%c0_11, %c0_12] : memref<2x128xf32, #tpu.memory_space<vmem>>, vector<2x128xf32>
    tpu.vector_store %arg9[%c0_11, %c0_12], %11 {strides = array<i32>} : memref<2x128xf32, #tpu.memory_space<vmem>>, vector<2x128xf32>,
    %c0_i32_13 = arith.constant 0 : i32
    %13 = arith.cmpi eq, %arg0, %c0_i32_13 : i32
    %14 = arith.extui %13 : i1 to i32
    %c0_i32_14 = arith.constant 0 : i32
    %15 = arith.cmpi ne, %14, %c0_i32_14 : i32
    scf.if %15 {
      %c0_15 = arith.constant 0 : index
      %c0_16 = arith.constant 0 : index
      %16 = vector.load %arg9[%c0_15, %c0_16] : memref<2x128xf32, #tpu.memory_space<vmem>>, vector<2x128xf32>
      %cst_17 = arith.constant 1.250000e-01 : f32
      %17 = vector.broadcast %cst_17 : f32 to vector<2x128xf32>
      %18 = arith.mulf %16, %17 : vector<2x128xf32>
      %c0_18 = arith.constant 0 : index
      %c0_19 = arith.constant 0 : index
      %19 = vector.load %arg3[%c0_18, %c0_19] : memref<128x128xf32, #tpu.memory_space<vmem>>, vector<128x128xf32>
      %cst_20 = arith.constant dense<0.000000e+00> : vector<2x128xf32>
      %20 = tpu.matmul %18, %19, %cst_20 {dimension_numbers = #tpu.dot_dimension_numbers<[1], [0], [0], [1], [0, 0, 1, 1], [], []>} : vector<2x128xf32>, vector<128x128xf32>, vector<2x128xf32> -> vector<2x128xf32>
      %c0_21 = arith.constant 0 : index
      %c0_22 = arith.constant 0 : index
      %21 = vector.load %arg4[%c0_21, %c0_22] : memref<1x128xf32, #tpu.memory_space<vmem>>, vector<1x128xf32>
      %22 = vector.broadcast %21 : vector<1x128xf32> to vector<2x128xf32>
      %23 = arith.addf %20, %22 : vector<2x128xf32>
      %24 = math.tanh %23 : vector<2x128xf32>
      %c0_23 = arith.constant 0 : index
      %c0_24 = arith.constant 0 : index
      %25 = vector.load %arg5[%c0_23, %c0_24] : memref<128x128xf32, #tpu.memory_space<vmem>>, vector<128x128xf32>
      %cst_25 = arith.constant dense<0.000000e+00> : vector<2x128xf32>
      %26 = tpu.matmul %24, %25, %cst_25 {dimension_numbers = #tpu.dot_dimension_numbers<[1], [0], [0], [1], [0, 0, 1, 1], [], []>} : vector<2x128xf32>, vector<128x128xf32>, vector<2x128xf32> -> vector<2x128xf32>
      %c0_26 = arith.constant 0 : index
      %c0_27 = arith.constant 0 : index
      %27 = vector.load %arg6[%c0_26, %c0_27] : memref<1x128xf32, #tpu.memory_space<vmem>>, vector<1x128xf32>
      %28 = vector.broadcast %27 : vector<1x128xf32> to vector<2x128xf32>
      %29 = arith.addf %26, %28 : vector<2x128xf32>
      %c0_28 = arith.constant 0 : index
      %c0_29 = arith.constant 0 : index
      %30 = vector.load %arg8[%c0_28, %c0_29] : memref<2x128xf32, #tpu.memory_space<vmem>>, vector<2x128xf32>
      tpu.vector_store %arg8[%c0_28, %c0_29], %29 {strides = array<i32>} : memref<2x128xf32, #tpu.memory_space<vmem>>, vector<2x128xf32>,
    } else {
    }
    return
  }
  func.func @transform_0(%arg0: i32) -> (i32, i32, i32) {
    %c0_i32 = arith.constant 0 : i32
    %c0_i32_0 = arith.constant 0 : i32
    %c0_i32_1 = arith.constant 0 : i32
    return %c0_i32, %arg0, %c0_i32_0 : i32, i32, i32
  }
  func.func @transform_1(%arg0: i32) -> (i32, i32) {
    %c0_i32 = arith.constant 0 : i32
    %c0_i32_0 = arith.constant 0 : i32
    %c0_i32_1 = arith.constant 0 : i32
    return %c0_i32, %c0_i32_0 : i32, i32
  }
  func.func @transform_2(%arg0: i32) -> (i32, i32) {
    %c0_i32 = arith.constant 0 : i32
    %c0_i32_0 = arith.constant 0 : i32
    %c0_i32_1 = arith.constant 0 : i32
    return %c0_i32, %c0_i32_0 : i32, i32
  }
  func.func @transform_3(%arg0: i32) -> (i32, i32) {
    %c0_i32 = arith.constant 0 : i32
    %c0_i32_0 = arith.constant 0 : i32
    %c0_i32_1 = arith.constant 0 : i32
    return %c0_i32, %c0_i32_0 : i32, i32
  }
  func.func @transform_4(%arg0: i32) -> (i32, i32) {
    %c0_i32 = arith.constant 0 : i32
    %c0_i32_0 = arith.constant 0 : i32
    %c0_i32_1 = arith.constant 0 : i32
    return %c0_i32, %c0_i32_0 : i32, i32
  }
  func.func @transform_5(%arg0: i32) -> (i32, i32) {
    %c0_i32 = arith.constant 0 : i32
    %c0_i32_0 = arith.constant 0 : i32
    %c0_i32_1 = arith.constant 0 : i32
    return %c0_i32, %c0_i32_0 : i32, i32
  }
  func.func @transform_6(%arg0: i32) -> (i32, i32, i32) {
    %c0_i32 = arith.constant 0 : i32
    %c0_i32_0 = arith.constant 0 : i32
    %c0_i32_1 = arith.constant 0 : i32
    return %c0_i32, %arg0, %c0_i32_0 : i32, i32, i32
  }
  func.func @transform_7(%arg0: i32) -> (i32, i32) {
    %c0_i32 = arith.constant 0 : i32
    %c0_i32_0 = arith.constant 0 : i32
    %c0_i32_1 = arith.constant 0 : i32
    return %c0_i32, %c0_i32_0 : i32, i32
  }
}

</mosaic_0001>

<llo_original>
// kernel: tpu_custom_call.1
$region0: #{tpu_custom_call.1}
  #allocation0 [shape = 'u32[]', space=smem, size = 0x4, offset = 0x4, fixed_abs, tag = 'smem constant byte address 0x4 - core index']
  #allocation1 [shape = 'u32[144,128]{1,0:T(1,128)}', space=vmem, size = 0x12000, scoped, tag = 'internal scratch']
  #allocation2 [shape = 'f32[2,128]{1,0:T(2,128)}', space=vmem, size = 0x400, scoped, tag = 'scratch operand']
  %s0 = inlined_call_operand.hbm [shape: bf16[2,8,128], index: 0, kind: input, shape index: {}]
  %s1 = inlined_call_operand.hbm [shape: bf16[128,128], index: 1, kind: input, shape index: {}]
  %s2 = inlined_call_operand.hbm [shape: f32[128,128], index: 2, kind: input, shape index: {}]
  %s3 = inlined_call_operand.vmem [shape: f32[1,128], index: 3, kind: input, shape index: {}]
  %s4 = inlined_call_operand.hbm [shape: f32[128,128], index: 4, kind: input, shape index: {}]
  %s5 = inlined_call_operand.vmem [shape: f32[1,128], index: 5, kind: input, shape index: {}]
  %s6 = inlined_call_operand.hbm [shape: f32[2,8,128], index: 6, kind: output, shape index: {0}]
  %s7 = inlined_call_operand.hbm [shape: f32[2,128], index: 7, kind: output, shape index: {1}]
  %8 = xla_tuple %s6, %s7
  %s9 = sld [smem:[#allocation0]]
  $region66: #{tpu_custom_call.1} parent=0
    _
  %s11 = ssub.s32 1, %s9
  %s12 = scalar_select 0, %s11, %s9
  $region1: #{tpu_custom_call.1} parent=0
    #allocation3 [shape = 'u8[4096]{0}', space=vmem, size = 0x1000, scoped, tag = 'input window, operand 0, single buffered']
    #allocation4 [shape = 's32[1]{0}', space=sflag, size = 0x4, scoped, tag = 'scoped memory for tpu_custom_call.1']
    #allocation5 [shape = 's32[1]{0}', space=sflag, size = 0x4, scoped, tag = 'scoped memory for tpu_custom_call.1']
    #allocation6 [shape = 'u8[32768]{0}', space=vmem, size = 0x8000, scoped, tag = 'input window, operand 1, single buffered']
    #allocation7 [shape = 's32[1]{0}', space=sflag, size = 0x4, scoped, tag = 'scoped memory for tpu_custom_call.1']
    #allocation8 [shape = 'u8[65536]{0}', space=vmem, size = 0x10000, scoped, tag = 'input window, operand 2, single buffered']
    #allocation9 [shape = 'u8[65536]{0}', space=vmem, size = 0x10000, scoped, tag = 'input window, operand 4, single buffered']
    #allocation10 [shape = 's32[1]{0}', space=sflag, size = 0x4, scoped, tag = 'scoped memory for tpu_custom_call.1']
    #allocation11 [shape = 'u8[8192]{0}', space=vmem, size = 0x2000, scoped, tag = 'output window, operand 0, single buffered']
    #allocation12 [shape = 'u8[1024]{0}', space=vmem, size = 0x400, scoped, tag = 'output window, operand 1, single buffered']
    #allocation13 [shape = 's32[1]{0}', space=sflag, size = 0x4, scoped, tag = 'scoped memory for tpu_custom_call.1']
    %13 = vsyncpa [#allocation4], 0
    %14 = vsyncpa [#allocation7], 0
    %15 = vsyncpa [#allocation10], 0
    %16 = vsyncpa [#allocation5], 0
    %17 = vsyncpa [#allocation13], 0
    // Predicated region
    $region2: #{tpu_custom_call.1} parent=1 // pred_check
      _
    $region3: #{tpu_custom_call.1} parent=1 // pred_check_branch
      %19 = sbr.rel (0) target = $region5
    $region4: #{tpu_custom_call.1} parent=1 // pred_region
      %s21 = ssub.s32 128, 128
      %22 = vsyncadd [#allocation4], %s21
      %s23 = sshll.u32 [#allocation3], 4
      %s24 = int_to_ptr.vmem [resolvable:$true] %s23
      %29 = dma.hbm_to_vmem [thread:$0]  %s0, 128, %s24, [#allocation4], 64, 64, 4
    $region5: #{tpu_custom_call.1} parent=1 // pred_fallthru
      _
    // Predicated region
    $region6: #{tpu_custom_call.1} parent=1 // pred_check
      _
    $region7: #{tpu_custom_call.1} parent=1 // pred_check_branch
      %31 = sbr.rel (0) target = $region9
    $region8: #{tpu_custom_call.1} parent=1 // pred_region
      %s33 = ssub.s32 1024, 1024
      %34 = vsyncadd [#allocation7], %s33
      %s35 = sshll.u32 [#allocation6], 4
      %s36 = int_to_ptr.vmem [resolvable:$true] %s35
      %41 = dma.hbm_to_vmem [thread:$0]  %s1, 1024, %s36, [#allocation7], 64, 64, 4
    $region9: #{tpu_custom_call.1} parent=1 // pred_fallthru
      _
    // Predicated region
    $region10: #{tpu_custom_call.1} parent=1 // pred_check
      _
    $region11: #{tpu_custom_call.1} parent=1 // pred_check_branch
      %43 = sbr.rel (0) target = $region13
    $region12: #{tpu_custom_call.1} parent=1 // pred_region
      %s45 = ssub.s32 2048, 2048
      %46 = vsyncadd [#allocation7], %s45
      %s47 = sshll.u32 [#allocation8], 4
      %s48 = int_to_ptr.vmem [resolvable:$true] %s47
      %53 = dma.hbm_to_vmem [thread:$0]  %s2, 2048, %s48, [#allocation7], 128, 128, 8
    $region13: #{tpu_custom_call.1} parent=1 // pred_fallthru
      _
    // Predicated region
    $region14: #{tpu_custom_call.1} parent=1 // pred_check
      _
    $region15: #{tpu_custom_call.1} parent=1 // pred_check_branch
      %55 = sbr.rel (0) target = $region17
    $region16: #{tpu_custom_call.1} parent=1 // pred_region
      _
    $region17: #{tpu_custom_call.1} parent=1 // pred_fallthru
      _
    // Predicated region
    $region18: #{tpu_custom_call.1} parent=1 // pred_check
      _
    $region19: #{tpu_custom_call.1} parent=1 // pred_check_branch
      %57 = sbr.rel (0) target = $region21
    $region20: #{tpu_custom_call.1} parent=1 // pred_region
      %s59 = ssub.s32 2048, 2048
      %60 = vsyncadd [#allocation10], %s59
      %s61 = sshll.u32 [#allocation9], 4
      %s62 = int_to_ptr.vmem [resolvable:$true] %s61
      %67 = dma.hbm_to_vmem [thread:$0]  %s4, 2048, %s62, [#allocation10], 128, 128, 8
    $region21: #{tpu_custom_call.1} parent=1 // pred_fallthru
      _
    // Predicated region
    $region22: #{tpu_custom_call.1} parent=1 // pred_check
      _
    $region23: #{tpu_custom_call.1} parent=1 // pred_check_branch
      %69 = sbr.rel (0) target = $region25
    $region24: #{tpu_custom_call.1} parent=1 // pred_region
      _
    $region25: #{tpu_custom_call.1} parent=1 // pred_fallthru
      _
    // Predicated region
    $region26: #{tpu_custom_call.1} parent=1 // pred_check
      _
    $region27: #{tpu_custom_call.1} parent=1 // pred_check_branch
      %71 = sbr.rel (0) target = $region29
    $region28: #{tpu_custom_call.1} parent=1 // pred_region
      %72 = dma.done [#allocation4], 128
    $region29: #{tpu_custom_call.1} parent=1 // pred_fallthru
      _
    // Predicated region
    $region30: #{tpu_custom_call.1} parent=1 // pred_check
      _
    $region31: #{tpu_custom_call.1} parent=1 // pred_check_branch
      %74 = sbr.rel (0) target = $region33
    $region32: #{tpu_custom_call.1} parent=1 // pred_region
      %75 = dma.done [#allocation7], 1024
    $region33: #{tpu_custom_call.1} parent=1 // pred_fallthru
      _
    // Predicated region
    $region34: #{tpu_custom_call.1} parent=1 // pred_check
      _
    $region35: #{tpu_custom_call.1} parent=1 // pred_check_branch
      %77 = sbr.rel (0) target = $region37
    $region36: #{tpu_custom_call.1} parent=1 // pred_region
      %78 = dma.done [#allocation7], 2048
    $region37: #{tpu_custom_call.1} parent=1 // pred_fallthru
      _
    // Predicated region
    $region38: #{tpu_custom_call.1} parent=1 // pred_check
      _
    $region39: #{tpu_custom_call.1} parent=1 // pred_check_branch
      %80 = sbr.rel (0) target = $region41
    $region40: #{tpu_custom_call.1} parent=1 // pred_region
      %81 = dma.done [#allocation10], 2048
    $region41: #{tpu_custom_call.1} parent=1 // pred_fallthru
      _
    %p83 = scmp.eq.s32.totalorder 0, 0
    // Predicated region
    $region42: #{tpu_custom_call.1} parent=1 // pred_check
      %p84 = pneg %p83
    $region43: #{tpu_custom_call.1} parent=1 // pred_check_branch
      %86 = sbr.rel (%p84) target = $region45
    $region44: #{tpu_custom_call.1} parent=1 // pred_region
      %87 = vst [vmem:[#allocation2] sm:$0x3] 0.0
    $region45: #{tpu_custom_call.1} parent=1 // pred_fallthru
      _
    %v88 = vld [vmem:[#allocation3] sm:$0xf]
    %v89 = vld [vmem:[#allocation3 + $0x4] sm:$0xf]
    %v90 = vld [vmem:[#allocation6] sm:$0xf]
    %v91 = vld [vmem:[#allocation6 + $0x4] sm:$0xf]
    %v92 = vld [vmem:[#allocation6 + $0x8] sm:$0xf]
    %v93 = vld [vmem:[#allocation6 + $0xc] sm:$0xf]
    %v94 = vld [vmem:[#allocation6 + $0x10] sm:$0xf]
    %v95 = vld [vmem:[#allocation6 + $0x14] sm:$0xf]
    %v96 = vld [vmem:[#allocation6 + $0x18] sm:$0xf]
    %v97 = vld [vmem:[#allocation6 + $0x1c] sm:$0xf]
    %v98 = vld [vmem:[#allocation6 + $0x20] sm:$0xf]
    %v99 = vld [vmem:[#allocation6 + $0x24] sm:$0xf]
    %v100 = vld [vmem:[#allocation6 + $0x28] sm:$0xf]
    %v101 = vld [vmem:[#allocation6 + $0x2c] sm:$0xf]
    %v102 = vld [vmem:[#allocation6 + $0x30] sm:$0xf]
    %v103 = vld [vmem:[#allocation6 + $0x34] sm:$0xf]
    %v104 = vld [vmem:[#allocation6 + $0x38] sm:$0xf]
    %v105 = vld [vmem:[#allocation6 + $0x3c] sm:$0xf]
    %v108 = vunpack.c.l.b16 %v88
    %v109 = vunpack.c.l.b16 %v89
    %v110 = vpack.c.b16 %v109, %v108
    %v128 = vunpack.c.l.b16 %v90
    %v129 = vunpack.c.l.b16 %v91
    %v130 = vunpack.c.l.b16 %v92
    %v131 = vunpack.c.l.b16 %v93
    %v132 = vunpack.c.l.b16 %v94
    %v133 = vunpack.c.l.b16 %v95
    %v134 = vunpack.c.l.b16 %v96
    %v135 = vunpack.c.l.b16 %v97
    %v136 = vunpack.c.l.b16 %v98
    %v137 = vunpack.c.l.b16 %v99
    %v138 = vunpack.c.l.b16 %v100
    %v139 = vunpack.c.l.b16 %v101
    %v140 = vunpack.c.l.b16 %v102
    %v141 = vunpack.c.l.b16 %v103
    %v142 = vunpack.c.l.b16 %v104
    %v143 = vunpack.c.l.b16 %v105
    %v144 = vpack.c.b16 %v129, %v128
    %v145 = vpack.c.b16 %v131, %v130
    %v146 = vpack.c.b16 %v133, %v132
    %v147 = vpack.c.b16 %v135, %v134
    %v148 = vpack.c.b16 %v137, %v136
    %v149 = vpack.c.b16 %v139, %v138
    %v150 = vpack.c.b16 %v141, %v140
    %v151 = vpack.c.b16 %v143, %v142
    %160 = vmatprep.subr.bf16.mxu0 0
    %161 = vmatpush1.bf16.msra.mxu0 %v144
    %162 = vmatprep.subr.bf16.mxu0 0
    %163 = vmatpush1.bf16.msra.mxu0 %v145
    %164 = vmatprep.subr.bf16.mxu0 0
    %165 = vmatpush1.bf16.msra.mxu0 %v146
    %166 = vmatprep.subr.bf16.mxu0 0
    %167 = vmatpush1.bf16.msra.mxu0 %v147
    %168 = vmatprep.subr.bf16.mxu0 0
    %169 = vmatpush1.bf16.msra.mxu0 %v148
    %170 = vmatprep.subr.bf16.mxu0 0
    %171 = vmatpush1.bf16.msra.mxu0 %v149
    %172 = vmatprep.subr.bf16.mxu0 0
    %173 = vmatpush1.bf16.msra.mxu0 %v150
    %174 = vmatprep.subr.bf16.mxu0 0
    %175 = vmatpush1.bf16.msra.mxu0 %v151
    %176 = vmatprep.subr.bf16.mxu0 0
    %177 = vmatpush1.bf16.msra.mxu0 0
    %178 = vmatprep.subr.bf16.mxu0 0
    %179 = vmatpush1.bf16.msra.mxu0 0
    %180 = vmatprep.subr.bf16.mxu0 0
    %181 = vmatpush1.bf16.msra.mxu0 0
    %182 = vmatprep.subr.bf16.mxu0 0
    %183 = vmatpush1.bf16.msra.mxu0 0
    %184 = vmatprep.subr.bf16.mxu0 0
    %185 = vmatpush1.bf16.msra.mxu0 0
    %186 = vmatprep.subr.bf16.mxu0 0
    %187 = vmatpush1.bf16.msra.mxu0 0
    %188 = vmatprep.subr.bf16.mxu0 0
    %189 = vmatpush1.bf16.msra.mxu0 0
    %190 = vmatprep.subr.bf16.mxu0 0
    %191 = vmatpush1.bf16.msra.mxu0 0
    %192 = vmatprep.mubr.bf16.mxu0 0
    %193 = vmatmul.mubr.bf16.gmra.mrb[0].mxu0 %v110
    %v194 = vpop.f32.mrb[0].mxu0
    %v195 = vadd.f32 0.0, %v194
    %v196 = vpop.f32.mrb[0].mxu0
    %v197 = vpop.f32.mrb[0].mxu0
    %v198 = vadd.f32 0.0, %v197
    %v199 = vpop.f32.mrb[0].mxu0
    %200 = vdwg.mxu0
    %201 = vst [vmem:[#allocation11] sm:$0xff] %v195
    %202 = vst [vmem:[#allocation11 + $0x8] sm:$0xff] %v198
    %v203 = vld [vmem:[#allocation2] sm:$0x3]
    %v204 = vrot.slane %v195, 4
    %v205 = vadd.f32 %v195, %v204
    %v206 = vrot.slane %v205, 2
    %v207 = vadd.f32 %v205, %v206
    %v208 = vrot.slane %v207, 1
    %v209 = vadd.f32 %v207, %v208
    %v210 = vrot.slane %v198, 4
    %v211 = vadd.f32 %v198, %v210
    %v212 = vrot.slane %v211, 2
    %v213 = vadd.f32 %v211, %v212
    %v214 = vrot.slane %v213, 1
    %v215 = vadd.f32 %v213, %v214
    %vm218 = vcmask 1041409
    %v219 = vsel %vm218, %v215, %v209
    %v221 = vadd.f32 %v203, %v219
    %222 = vst [vmem:[#allocation2] sm:$0x3] %v221
    // Predicated region
    $region46: #{tpu_custom_call.1} parent=1 // pred_check
      %p223 = pneg %p83
    $region47: #{tpu_custom_call.1} parent=1 // pred_check_branch
      %225 = sbr.rel (%p223) target = $region49
    $region48: #{tpu_custom_call.1} parent=1 // pred_region
      %v226 = vld [vmem:[#allocation2] sm:$0x3]
      %v227 = vmul.f32 %v226, 0.125
      %v228 = vld [vmem:[#allocation8] sm:$0xff]
      %v229 = vld [vmem:[#allocation8 + $0x8] sm:$0xff]
      %v230 = vld [vmem:[#allocation8 + $0x10] sm:$0xff]
      %v231 = vld [vmem:[#allocation8 + $0x18] sm:$0xff]
      %v232 = vld [vmem:[#allocation8 + $0x20] sm:$0xff]
      %v233 = vld [vmem:[#allocation8 + $0x28] sm:$0xff]
      %v234 = vld [vmem:[#allocation8 + $0x30] sm:$0xff]
      %v235 = vld [vmem:[#allocation8 + $0x38] sm:$0xff]
      %v236 = vld [vmem:[#allocation8 + $0x40] sm:$0xff]
      %v237 = vld [vmem:[#allocation8 + $0x48] sm:$0xff]
      %v238 = vld [vmem:[#allocation8 + $0x50] sm:$0xff]
      %v239 = vld [vmem:[#allocation8 + $0x58] sm:$0xff]
      %v240 = vld [vmem:[#allocation8 + $0x60] sm:$0xff]
      %v241 = vld [vmem:[#allocation8 + $0x68] sm:$0xff]
      %v242 = vld [vmem:[#allocation8 + $0x70] sm:$0xff]
      %v243 = vld [vmem:[#allocation8 + $0x78] sm:$0xff]
      %v244 = vld [vmem:[%s3] sm:$0x1]
      %v246 = vlaneseq
      %v247 = vshrl.u32 %v246, 7
      %v248 = vsub.s32 0, %v247
      %v249 = vrot.slane %v244, %v248
      %251 = vmatprep.subr.mxu0 0.0
      %252 = vmatpush1.msra.mxu0 %v228
      %253 = vmatprep.subr.mxu0 0.0
      %254 = vmatpush1.msra.mxu0 %v229
      %255 = vmatprep.subr.mxu0 0.0
      %256 = vmatpush1.msra.mxu0 %v230
      %257 = vmatprep.subr.mxu0 0.0
      %258 = vmatpush1.msra.mxu0 %v231
      %259 = vmatprep.subr.mxu0 0.0
      %260 = vmatpush1.msra.mxu0 %v232
      %261 = vmatprep.subr.mxu0 0.0
      %262 = vmatpush1.msra.mxu0 %v233
      %263 = vmatprep.subr.mxu0 0.0
      %264 = vmatpush1.msra.mxu0 %v234
      %265 = vmatprep.subr.mxu0 0.0
      %266 = vmatpush1.msra.mxu0 %v235
      %267 = vmatprep.subr.mxu0 0.0
      %268 = vmatpush1.msra.mxu0 %v236
      %269 = vmatprep.subr.mxu0 0.0
      %270 = vmatpush1.msra.mxu0 %v237
      %271 = vmatprep.subr.mxu0 0.0
      %272 = vmatpush1.msra.mxu0 %v238
      %273 = vmatprep.subr.mxu0 0.0
      %274 = vmatpush1.msra.mxu0 %v239
      %275 = vmatprep.subr.mxu0 0.0
      %276 = vmatpush1.msra.mxu0 %v240
      %277 = vmatprep.subr.mxu0 0.0
      %278 = vmatpush1.msra.mxu0 %v241
      %279 = vmatprep.subr.mxu0 0.0
      %280 = vmatpush1.msra.mxu0 %v242
      %281 = vmatprep.subr.mxu0 0.0
      %282 = vmatpush1.msra.mxu0 %v243
      %283 = vmatprep.subr.mxu0 0.0
      %284 = vmatpush1.msra.mxu0 0.0
      %285 = vmatprep.subr.mxu0 0.0
      %286 = vmatpush1.msra.mxu0 0.0
      %287 = vmatprep.subr.mxu0 0.0
      %288 = vmatpush1.msra.mxu0 0.0
      %289 = vmatprep.subr.mxu0 0.0
      %290 = vmatpush1.msra.mxu0 0.0
      %291 = vmatprep.subr.mxu0 0.0
      %292 = vmatpush1.msra.mxu0 0.0
      %293 = vmatprep.subr.mxu0 0.0
      %294 = vmatpush1.msra.mxu0 0.0
      %295 = vmatprep.subr.mxu0 0.0
      %296 = vmatpush1.msra.mxu0 0.0
      %297 = vmatprep.subr.mxu0 0.0
      %298 = vmatpush1.msra.mxu0 0.0
      %299 = vmatprep.subr.mxu0 0.0
      %300 = vmatpush1.msra.mxu0 0.0
      %301 = vmatprep.subr.mxu0 0.0
      %302 = vmatpush1.msra.mxu0 0.0
      %303 = vmatprep.subr.mxu0 0.0
      %304 = vmatpush1.msra.mxu0 0.0
      %305 = vmatprep.subr.mxu0 0.0
      %306 = vmatpush1.msra.mxu0 0.0
      %307 = vmatprep.subr.mxu0 0.0
      %308 = vmatpush1.msra.mxu0 0.0
      %309 = vmatprep.subr.mxu0 0.0
      %310 = vmatpush1.msra.mxu0 0.0
      %311 = vmatprep.subr.mxu0 0.0
      %312 = vmatpush1.msra.mxu0 0.0
      %313 = vmatprep.subr.mxu0 0.0
      %314 = vmatpush1.msra.mxu0 0.0
      %315 = vmatprep.mubr.f32.mxu0 0.0
      %316 = vmatmul.mubr.f32.gmra.mrb[0].mxu0 %v227
      %v317 = vpop.f32.mrb[0].mxu0
      %v318 = vadd.f32 %v249, %v317
      %v319 = vpop.f32.mrb[0].mxu0
      %320 = vdwg.mxu0
      %v321 = vtanh.pop %v318
      %v322 = vld [vmem:[#allocation9] sm:$0xff]
      %v323 = vld [vmem:[#allocation9 + $0x8] sm:$0xff]
      %v324 = vld [vmem:[#allocation9 + $0x10] sm:$0xff]
      %v325 = vld [vmem:[#allocation9 + $0x18] sm:$0xff]
      %v326 = vld [vmem:[#allocation9 + $0x20] sm:$0xff]
      %v327 = vld [vmem:[#allocation9 + $0x28] sm:$0xff]
      %v328 = vld [vmem:[#allocation9 + $0x30] sm:$0xff]
      %v329 = vld [vmem:[#allocation9 + $0x38] sm:$0xff]
      %v330 = vld [vmem:[#allocation9 + $0x40] sm:$0xff]
      %v331 = vld [vmem:[#allocation9 + $0x48] sm:$0xff]
      %v332 = vld [vmem:[#allocation9 + $0x50] sm:$0xff]
      %v333 = vld [vmem:[#allocation9 + $0x58] sm:$0xff]
      %v334 = vld [vmem:[#allocation9 + $0x60] sm:$0xff]
      %v335 = vld [vmem:[#allocation9 + $0x68] sm:$0xff]
      %v336 = vld [vmem:[#allocation9 + $0x70] sm:$0xff]
      %v337 = vld [vmem:[#allocation9 + $0x78] sm:$0xff]
      %v338 = vld [vmem:[%s5] sm:$0x1]
      %v340 = vlaneseq
      %v341 = vshrl.u32 %v340, 7
      %v342 = vsub.s32 0, %v341
      %v343 = vrot.slane %v338, %v342
      %345 = vmatprep.subr.mxu0 0.0
      %346 = vmatpush1.msra.mxu0 %v322
      %347 = vmatprep.subr.mxu0 0.0
      %348 = vmatpush1.msra.mxu0 %v323
      %349 = vmatprep.subr.mxu0 0.0
      %350 = vmatpush1.msra.mxu0 %v324
      %351 = vmatprep.subr.mxu0 0.0
      %352 = vmatpush1.msra.mxu0 %v325
      %353 = vmatprep.subr.mxu0 0.0
      %354 = vmatpush1.msra.mxu0 %v326
      %355 = vmatprep.subr.mxu0 0.0
      %356 = vmatpush1.msra.mxu0 %v327
      %357 = vmatprep.subr.mxu0 0.0
      %358 = vmatpush1.msra.mxu0 %v328
      %359 = vmatprep.subr.mxu0 0.0
      %360 = vmatpush1.msra.mxu0 %v329
      %361 = vmatprep.subr.mxu0 0.0
      %362 = vmatpush1.msra.mxu0 %v330
      %363 = vmatprep.subr.mxu0 0.0
      %364 = vmatpush1.msra.mxu0 %v331
      %365 = vmatprep.subr.mxu0 0.0
      %366 = vmatpush1.msra.mxu0 %v332
      %367 = vmatprep.subr.mxu0 0.0
      %368 = vmatpush1.msra.mxu0 %v333
      %369 = vmatprep.subr.mxu0 0.0
      %370 = vmatpush1.msra.mxu0 %v334
      %371 = vmatprep.subr.mxu0 0.0
      %372 = vmatpush1.msra.mxu0 %v335
      %373 = vmatprep.subr.mxu0 0.0
      %374 = vmatpush1.msra.mxu0 %v336
      %375 = vmatprep.subr.mxu0 0.0
      %376 = vmatpush1.msra.mxu0 %v337
      %377 = vmatprep.subr.mxu0 0.0
      %378 = vmatpush1.msra.mxu0 0.0
      %379 = vmatprep.subr.mxu0 0.0
      %380 = vmatpush1.msra.mxu0 0.0
      %381 = vmatprep.subr.mxu0 0.0
      %382 = vmatpush1.msra.mxu0 0.0
      %383 = vmatprep.subr.mxu0 0.0
      %384 = vmatpush1.msra.mxu0 0.0
      %385 = vmatprep.subr.mxu0 0.0
      %386 = vmatpush1.msra.mxu0 0.0
      %387 = vmatprep.subr.mxu0 0.0
      %388 = vmatpush1.msra.mxu0 0.0
      %389 = vmatprep.subr.mxu0 0.0
      %390 = vmatpush1.msra.mxu0 0.0
      %391 = vmatprep.subr.mxu0 0.0
      %392 = vmatpush1.msra.mxu0 0.0
      %393 = vmatprep.subr.mxu0 0.0
      %394 = vmatpush1.msra.mxu0 0.0
      %395 = vmatprep.subr.mxu0 0.0
      %396 = vmatpush1.msra.mxu0 0.0
      %397 = vmatprep.subr.mxu0 0.0
      %398 = vmatpush1.msra.mxu0 0.0
      %399 = vmatprep.subr.mxu0 0.0
      %400 = vmatpush1.msra.mxu0 0.0
      %401 = vmatprep.subr.mxu0 0.0
      %402 = vmatpush1.msra.mxu0 0.0
      %403 = vmatprep.subr.mxu0 0.0
      %404 = vmatpush1.msra.mxu0 0.0
      %405 = vmatprep.subr.mxu0 0.0
      %406 = vmatpush1.msra.mxu0 0.0
      %407 = vmatprep.subr.mxu0 0.0
      %408 = vmatpush1.msra.mxu0 0.0
      %409 = vmatprep.mubr.f32.mxu0 0.0
      %410 = vmatmul.mubr.f32.gmra.mrb[0].mxu0 %v321
      %v411 = vpop.f32.mrb[0].mxu0
      %v412 = vadd.f32 %v343, %v411
      %v413 = vpop.f32.mrb[0].mxu0
      %414 = vdwg.mxu0
      %415 = vst [vmem:[#allocation12] sm:$0x3] %v412
    $region49: #{tpu_custom_call.1} parent=1 // pred_fallthru
      _
    // Predicated region
    $region50: #{tpu_custom_call.1} parent=1 // pred_check
      _
    $region51: #{tpu_custom_call.1} parent=1 // pred_check_branch
      %417 = sbr.rel (0) target = $region53
    $region52: #{tpu_custom_call.1} parent=1 // pred_region
      %s419 = ssub.s32 256, 256
      %420 = vsyncadd [#allocation5], %s419
      %s421 = sshll.u32 [#allocation11], 4
      %s422 = int_to_ptr.vmem [resolvable:$true] %s421
      %427 = dma.vmem_to_hbm [thread:$0]  %s422, 256, %s6, [#allocation5], 128, 128, 8
    $region53: #{tpu_custom_call.1} parent=1 // pred_fallthru
      _
    // Predicated region
    $region54: #{tpu_custom_call.1} parent=1 // pred_check
      _
    $region55: #{tpu_custom_call.1} parent=1 // pred_check_branch
      %429 = sbr.rel (0) target = $region57
    $region56: #{tpu_custom_call.1} parent=1 // pred_region
      %s431 = ssub.s32 32, 32
      %432 = vsyncadd [#allocation13], %s431
      %s434 = sshll.u32 [#allocation12], 4
      %s435 = int_to_ptr.vmem [resolvable:$true] %s434
      %437 = dma.vmem_to_hbm [thread:$0]  %s435, 32, %s7, [#allocation13]
    $region57: #{tpu_custom_call.1} parent=1 // pred_fallthru
      _
    // Predicated region
    $region58: #{tpu_custom_call.1} parent=1 // pred_check
      _
    $region59: #{tpu_custom_call.1} parent=1 // pred_check_branch
      %439 = sbr.rel (0) target = $region61
    $region60: #{tpu_custom_call.1} parent=1 // pred_region
      %440 = dma.done [#allocation5], 256
    $region61: #{tpu_custom_call.1} parent=1 // pred_fallthru
      _
    // Predicated region
    $region62: #{tpu_custom_call.1} parent=1 // pred_check
      _
    $region63: #{tpu_custom_call.1} parent=1 // pred_check_branch
      %442 = sbr.rel (0) target = $region65
    $region64: #{tpu_custom_call.1} parent=1 // pred_region
      %443 = dma.done [#allocation13], 32
    $region65: #{tpu_custom_call.1} parent=1 // pred_fallthru
      _
    %444 = vsyncpa [#allocation4], 1
    %445 = vsyncpa [#allocation7], 1
    %446 = vsyncpa [#allocation10], 1
    %447 = vsyncpa [#allocation5], 1
    %448 = vsyncpa [#allocation13], 1

</llo_original>
